<compile_context>
chip_gen: v6e
topology: v6e:2x2x1
jax: 0.10.0
libtpu: 0.0.40
codegen_flags: <defaults>
</compile_context>

<pallas_src>
import jax
import jax.numpy as jnp
from jax.experimental import pallas as pl
from jax.experimental.pallas import tpu as pltpu


def _round_up(n, m):
    return (n + m - 1) // m * m


def residual_block_kernel(x_ref, w1_ref, t1_ref, w2_ref, t2_ref, ws_ref, bs_ref, o_ref):
    x = x_ref[...]                                                   # (TB, Din_p)

    # shortcut = Linear(input_dim -> output_dim), f32 accumulation
    shortcut = jnp.dot(x, ws_ref[...], preferred_element_type=jnp.float32) + bs_ref[...]

    # h = relu(bn1(fc1(x)))   -- BN1 scale and fc1 bias folded into w1 / t1
    h = jnp.dot(x, w1_ref[...], preferred_element_type=jnp.float32) + t1_ref[...]
    h = jnp.maximum(h, 0.0)
    # dropout -> identity (eval mode)

    # h = bn2(fc2(h))         -- BN2 scale and fc2 bias folded into w2 / t2
    h = jnp.dot(h.astype(w2_ref.dtype), w2_ref[...],
                preferred_element_type=jnp.float32) + t2_ref[...]

    # out = relu(h + shortcut)   (epilogue in f32)
    o_ref[...] = jnp.maximum(h + shortcut, 0.0)


def fold_bn(gamma, beta, running_mean, running_var, eps=1e-5):
    scale = gamma / jnp.sqrt(running_var + eps)
    shift = beta - running_mean * scale
    return scale, shift


def residual_block_forward(x, params, *, compute_dtype=jnp.bfloat16, max_block_b=512):
    B, Din = x.shape
    Dout = params["w1"].shape[1]
    f32 = jnp.float32

    # ---- host-side constant folding: BN (eval) + biases into weights / shifts ----
    s1, t1 = fold_bn(params["bn1_gamma"], params["bn1_beta"],
                     params["bn1_mean"], params["bn1_var"])
    s2, t2 = fold_bn(params["bn2_gamma"], params["bn2_beta"],
                     params["bn2_mean"], params["bn2_var"])
    w1f = params["w1"].astype(f32) * s1[None, :]
    t1f = s1 * params["b1"].astype(f32) + t1
    w2f = params["w2"].astype(f32) * s2[None, :]
    t2f = s2 * params["b2"].astype(f32) + t2

    if params.get("ws") is not None:                 # Linear shortcut (Din != Dout)
        wsf = params["ws"].astype(f32)
        bsf = params["bs"].astype(f32)
    else:                                            # Identity shortcut (Din == Dout)
        wsf = jnp.eye(Din, Dout, dtype=f32)
        bsf = jnp.zeros((Dout,), f32)

    # ---- padding to hardware-friendly shapes (lane-dense, MXU-aligned) ----
    Din_p = _round_up(Din, 128)
    Dout_p = _round_up(Dout, 128)
    act_bytes = jnp.dtype(compute_dtype).itemsize
    row_align = 8 * (4 // act_bytes)                 # 8 rows (f32) / 16 rows (bf16)

    # ---- batch tiling: amortize per-step overhead, stay inside VMEM budget ----
    TB = _round_up(min(max_block_b, _round_up(B, row_align)), row_align)

    def vmem_estimate(tb):
        x_tile = tb * Din_p * act_bytes
        o_tile = tb * Dout_p * 4
        weights = (2 * Din_p * Dout_p + Dout_p * Dout_p) * act_bytes
        vecs = 3 * Dout_p * 4
        return 2 * (x_tile + o_tile + weights + vecs)   # double-buffered estimate

    VMEM_BUDGET = 24 * 1024 * 1024
    while TB > row_align and vmem_estimate(TB) > VMEM_BUDGET:
        TB = max(row_align, _round_up(TB // 2, row_align))

    B_p = _round_up(B, TB)
    grid = (B_p // TB,)

    def pad2(a, r, c, dtype):
        a = a.astype(dtype)
        return jnp.pad(a, ((0, r - a.shape[0]), (0, c - a.shape[1])))

    def pad_row(v, c):
        v = v.astype(f32).reshape(1, -1)
        return jnp.pad(v, ((0, 0), (0, c - v.shape[1])))

    x_p = pad2(x, B_p, Din_p, compute_dtype)
    w1_p = pad2(w1f, Din_p, Dout_p, compute_dtype)
    w2_p = pad2(w2f, Dout_p, Dout_p, compute_dtype)
    ws_p = pad2(wsf, Din_p, Dout_p, compute_dtype)
    t1_p = pad_row(t1f, Dout_p)
    t2_p = pad_row(t2f, Dout_p)
    bs_p = pad_row(bsf, Dout_p)

    full = lambda shape: pl.BlockSpec(shape, lambda i: (0,) * len(shape))

    flops = 2 * B_p * Dout_p * (2 * Din_p + Dout_p)
    bytes_accessed = int(
        x_p.size * act_bytes
        + (w1_p.size + w2_p.size + ws_p.size) * act_bytes
        + (t1_p.size + t2_p.size + bs_p.size) * 4
        + B_p * Dout_p * 4)

    kernel = pl.pallas_call(
        residual_block_kernel,
        out_shape=jax.ShapeDtypeStruct((B_p, Dout_p), f32),
        grid_spec=pltpu.PrefetchScalarGridSpec(
            num_scalar_prefetch=0,
            grid=grid,
            in_specs=[
                pl.BlockSpec((TB, Din_p), lambda i: (i, 0)),   # x batch tile
                full((Din_p, Dout_p)),                         # w1 (BN1-folded)
                full((1, Dout_p)),                             # t1 (bias + BN1 shift)
                full((Dout_p, Dout_p)),                        # w2 (BN2-folded)
                full((1, Dout_p)),                             # t2 (bias + BN2 shift)
                full((Din_p, Dout_p)),                         # shortcut weight
                full((1, Dout_p)),                             # shortcut bias
            ],
            out_specs=pl.BlockSpec((TB, Dout_p), lambda i: (i, 0)),
        ),
        compiler_params=pltpu.CompilerParams(
            dimension_semantics=("parallel",)),
        cost_estimate=pl.CostEstimate(
            flops=flops, transcendentals=0, bytes_accessed=bytes_accessed),
    )

    out_p = kernel(x_p, w1_p, t1_p, w2_p, t2_p, ws_p, bs_p)
    return out_p[:B, :Dout]


def init_params(key, input_dim, output_dim):
    """Deterministic init matching PyTorch nn.Linear / nn.BatchNorm1d defaults."""
    def linear_init(k, fan_in, fan_out):
        kw, kb = jax.random.split(k)
        bound = 1.0 / jnp.sqrt(fan_in)
        w = jax.random.uniform(kw, (fan_in, fan_out), jnp.float32, -bound, bound)
        b = jax.random.uniform(kb, (fan_out,), jnp.float32, -bound, bound)
        return w, b

    k1, k2, k3 = jax.random.split(key, 3)
    w1, b1 = linear_init(k1, input_dim, output_dim)
    w2, b2 = linear_init(k2, output_dim, output_dim)
    ws, bs = linear_init(k3, input_dim, output_dim)  # shortcut (input_dim != output_dim)

    ones = jnp.ones((output_dim,), jnp.float32)
    zeros = jnp.zeros((output_dim,), jnp.float32)
    return dict(
        w1=w1, b1=b1, w2=w2, b2=b2, ws=ws, bs=bs,
        bn1_gamma=ones, bn1_beta=zeros, bn1_mean=zeros, bn1_var=ones,
        bn2_gamma=ones, bn2_beta=zeros, bn2_mean=zeros, bn2_var=ones,
    )


def reference_forward(x, params):
    """Pure-JAX f32 reference of the eval-mode forward pass."""
    s1, t1 = fold_bn(params["bn1_gamma"], params["bn1_beta"],
                     params["bn1_mean"], params["bn1_var"])
    s2, t2 = fold_bn(params["bn2_gamma"], params["bn2_beta"],
                     params["bn2_mean"], params["bn2_var"])
    shortcut = x @ params["ws"] + params["bs"]
    h = x @ params["w1"] + params["b1"]
    h = jnp.maximum(h * s1 + t1, 0.0)
    h = h @ params["w2"] + params["b2"]
    h = h * s2 + t2
    return jnp.maximum(h + shortcut, 0.0)


if __name__ == "__main__":
    B, input_dim, output_dim = 8, 16, 32

    key = jax.random.PRNGKey(0)
    k_x, k_p = jax.random.split(key)
    x = jax.random.normal(k_x, (B, input_dim), jnp.float32)
    params = init_params(k_p, input_dim, output_dim)

    ref = reference_forward(x, params)

    # Default (bf16 MXU inputs, f32 accumulate/epilogue) -> looser tolerance.
    out = residual_block_forward(x, params)
    out = jax.block_until_ready(out)
    assert out.shape == (B, output_dim)
    assert jnp.allclose(out, ref, atol=5e-2, rtol=5e-2), "bf16 kernel mismatch vs reference"

    # Full-f32 path: bit-level agreement with the reference math.
    out_f32 = residual_block_forward(x, params, compute_dtype=jnp.float32)
    out_f32 = jax.block_until_ready(out_f32)
    assert jnp.allclose(out_f32, ref, atol=1e-5, rtol=1e-5), "f32 kernel mismatch vs reference"

    print("KERNEL_OK")
</pallas_src>

<mosaic_0001>
module attributes {stable_mosaic.version = 11 : i64} {
  func.func @residual_block_kernel(%arg0: i32, %arg1: memref<16x128xbf16, #tpu.memory_space<vmem>>, %arg2: memref<128x128xbf16, #tpu.memory_space<vmem>>, %arg3: memref<1x128xf32, #tpu.memory_space<vmem>>, %arg4: memref<128x128xbf16, #tpu.memory_space<vmem>>, %arg5: memref<1x128xf32, #tpu.memory_space<vmem>>, %arg6: memref<128x128xbf16, #tpu.memory_space<vmem>>, %arg7: memref<1x128xf32, #tpu.memory_space<vmem>>, %arg8: memref<16x128xf32, #tpu.memory_space<vmem>>) attributes {dimension_semantics = [#tpu.dimension_semantics<parallel>], iteration_bounds = array<i64: 1>, scalar_prefetch = 0 : i64, scratch_operands = 0 : i64, tpu.core_type = #tpu.core_type<tc>, window_params = [{transform_indices = @transform_0, window_bounds = array<i64: 16, 128>}, {pipeline_mode = #tpu.pipeline_mode<synchronous>, transform_indices = @transform_1, window_bounds = array<i64: 128, 128>}, {pipeline_mode = #tpu.pipeline_mode<synchronous>, transform_indices = @transform_2, window_bounds = array<i64: 1, 128>}, {pipeline_mode = #tpu.pipeline_mode<synchronous>, transform_indices = @transform_3, window_bounds = array<i64: 128, 128>}, {pipeline_mode = #tpu.pipeline_mode<synchronous>, transform_indices = @transform_4, window_bounds = array<i64: 1, 128>}, {pipeline_mode = #tpu.pipeline_mode<synchronous>, transform_indices = @transform_5, window_bounds = array<i64: 128, 128>}, {pipeline_mode = #tpu.pipeline_mode<synchronous>, transform_indices = @transform_6, window_bounds = array<i64: 1, 128>}, {transform_indices = @transform_7, window_bounds = array<i64: 16, 128>}]} {
    %c0 = arith.constant 0 : index
    %c0_0 = arith.constant 0 : index
    %0 = vector.load %arg1[%c0, %c0_0] : memref<16x128xbf16, #tpu.memory_space<vmem>>, vector<16x128xbf16>
    %c0_1 = arith.constant 0 : index
    %c0_2 = arith.constant 0 : index
    %1 = vector.load %arg6[%c0_1, %c0_2] : memref<128x128xbf16, #tpu.memory_space<vmem>>, vector<128x128xbf16>
    %cst = arith.constant dense<0.000000e+00> : vector<16x128xf32>
    %2 = tpu.matmul %0, %1, %cst {dimension_numbers = #tpu.dot_dimension_numbers<[1], [0], [0], [1], [0, 0, 1, 1], [], []>} : vector<16x128xbf16>, vector<128x128xbf16>, vector<16x128xf32> -> vector<16x128xf32>
    %c0_3 = arith.constant 0 : index
    %c0_4 = arith.constant 0 : index
    %3 = vector.load %arg7[%c0_3, %c0_4] : memref<1x128xf32, #tpu.memory_space<vmem>>, vector<1x128xf32>
    %4 = vector.broadcast %3 : vector<1x128xf32> to vector<16x128xf32>
    %5 = arith.addf %2, %4 : vector<16x128xf32>
    %c0_5 = arith.constant 0 : index
    %c0_6 = arith.constant 0 : index
    %6 = vector.load %arg2[%c0_5, %c0_6] : memref<128x128xbf16, #tpu.memory_space<vmem>>, vector<128x128xbf16>
    %cst_7 = arith.constant dense<0.000000e+00> : vector<16x128xf32>
    %7 = tpu.matmul %0, %6, %cst_7 {dimension_numbers = #tpu.dot_dimension_numbers<[1], [0], [0], [1], [0, 0, 1, 1], [], []>} : vector<16x128xbf16>, vector<128x128xbf16>, vector<16x128xf32> -> vector<16x128xf32>
    %c0_8 = arith.constant 0 : index
    %c0_9 = arith.constant 0 : index
    %8 = vector.load %arg3[%c0_8, %c0_9] : memref<1x128xf32, #tpu.memory_space<vmem>>, vector<1x128xf32>
    %9 = vector.broadcast %8 : vector<1x128xf32> to vector<16x128xf32>
    %10 = arith.addf %7, %9 : vector<16x128xf32>
    %cst_10 = arith.constant 0.000000e+00 : f32
    %11 = vector.broadcast %cst_10 : f32 to vector<16x128xf32>
    %12 = arith.maximumf %10, %11 : vector<16x128xf32>
    %13 = arith.truncf %12 : vector<16x128xf32> to vector<16x128xbf16>
    %c0_11 = arith.constant 0 : index
    %c0_12 = arith.constant 0 : index
    %14 = vector.load %arg4[%c0_11, %c0_12] : memref<128x128xbf16, #tpu.memory_space<vmem>>, vector<128x128xbf16>
    %cst_13 = arith.constant dense<0.000000e+00> : vector<16x128xf32>
    %15 = tpu.matmul %13, %14, %cst_13 {dimension_numbers = #tpu.dot_dimension_numbers<[1], [0], [0], [1], [0, 0, 1, 1], [], []>} : vector<16x128xbf16>, vector<128x128xbf16>, vector<16x128xf32> -> vector<16x128xf32>
    %c0_14 = arith.constant 0 : index
    %c0_15 = arith.constant 0 : index
    %16 = vector.load %arg5[%c0_14, %c0_15] : memref<1x128xf32, #tpu.memory_space<vmem>>, vector<1x128xf32>
    %17 = vector.broadcast %16 : vector<1x128xf32> to vector<16x128xf32>
    %18 = arith.addf %15, %17 : vector<16x128xf32>
    %19 = arith.addf %18, %5 : vector<16x128xf32>
    %cst_16 = arith.constant 0.000000e+00 : f32
    %20 = vector.broadcast %cst_16 : f32 to vector<16x128xf32>
    %21 = arith.maximumf %19, %20 : vector<16x128xf32>
    %c0_17 = arith.constant 0 : index
    %c0_18 = arith.constant 0 : index
    %22 = vector.load %arg8[%c0_17, %c0_18] : memref<16x128xf32, #tpu.memory_space<vmem>>, vector<16x128xf32>
    tpu.vector_store %arg8[%c0_17, %c0_18], %21 {strides = array<i32>} : memref<16x128xf32, #tpu.memory_space<vmem>>, vector<16x128xf32>,
    return
  }
  func.func @transform_0(%arg0: i32) -> (i32, i32) {
    %c0_i32 = arith.constant 0 : i32
    %c0_i32_0 = arith.constant 0 : i32
    return %arg0, %c0_i32 : i32, i32
  }
  func.func @transform_1(%arg0: i32) -> (i32, i32) {
    %c0_i32 = arith.constant 0 : i32
    %c0_i32_0 = arith.constant 0 : i32
    %c0_i32_1 = arith.constant 0 : i32
    return %c0_i32, %c0_i32_0 : i32, i32
  }
  func.func @transform_2(%arg0: i32) -> (i32, i32) {
    %c0_i32 = arith.constant 0 : i32
    %c0_i32_0 = arith.constant 0 : i32
    %c0_i32_1 = arith.constant 0 : i32
    return %c0_i32, %c0_i32_0 : i32, i32
  }
  func.func @transform_3(%arg0: i32) -> (i32, i32) {
    %c0_i32 = arith.constant 0 : i32
    %c0_i32_0 = arith.constant 0 : i32
    %c0_i32_1 = arith.constant 0 : i32
    return %c0_i32, %c0_i32_0 : i32, i32
  }
  func.func @transform_4(%arg0: i32) -> (i32, i32) {
    %c0_i32 = arith.constant 0 : i32
    %c0_i32_0 = arith.constant 0 : i32
    %c0_i32_1 = arith.constant 0 : i32
    return %c0_i32, %c0_i32_0 : i32, i32
  }
  func.func @transform_5(%arg0: i32) -> (i32, i32) {
    %c0_i32 = arith.constant 0 : i32
    %c0_i32_0 = arith.constant 0 : i32
    %c0_i32_1 = arith.constant 0 : i32
    return %c0_i32, %c0_i32_0 : i32, i32
  }
  func.func @transform_6(%arg0: i32) -> (i32, i32) {
    %c0_i32 = arith.constant 0 : i32
    %c0_i32_0 = arith.constant 0 : i32
    %c0_i32_1 = arith.constant 0 : i32
    return %c0_i32, %c0_i32_0 : i32, i32
  }
  func.func @transform_7(%arg0: i32) -> (i32, i32) {
    %c0_i32 = arith.constant 0 : i32
    %c0_i32_0 = arith.constant 0 : i32
    return %arg0, %c0_i32 : i32, i32
  }
}

</mosaic_0001>

<llo_original>
// kernel: tpu_custom_call.1
$region0: #{tpu_custom_call.1}
  #allocation0 [shape = 'u32[]', space=smem, size = 0x4, offset = 0x4, fixed_abs, tag = 'smem constant byte address 0x4 - core index']
  #allocation1 [shape = 'u32[144,128]{1,0:T(1,128)}', space=vmem, size = 0x12000, scoped, tag = 'internal scratch']
  %s0 = inlined_call_operand.hbm [shape: bf16[16,128], index: 0, kind: input, shape index: {}]
  %s1 = inlined_call_operand.hbm [shape: bf16[128,128], index: 1, kind: input, shape index: {}]
  %s2 = inlined_call_operand.vmem [shape: f32[1,128], index: 2, kind: input, shape index: {}]
  %s3 = inlined_call_operand.hbm [shape: bf16[128,128], index: 3, kind: input, shape index: {}]
  %s4 = inlined_call_operand.vmem [shape: f32[1,128], index: 4, kind: input, shape index: {}]
  %s5 = inlined_call_operand.hbm [shape: bf16[128,128], index: 5, kind: input, shape index: {}]
  %s6 = inlined_call_operand.vmem [shape: f32[1,128], index: 6, kind: input, shape index: {}]
  %s7 = inlined_call_operand.hbm [shape: f32[16,128], index: 7, kind: output, shape index: {}]
  %s8 = sld [smem:[#allocation0]]
  $region54: #{tpu_custom_call.1} parent=0
    _
  %s10 = ssub.s32 1, %s8
  %s11 = scalar_select 0, %s10, %s8
  $region1: #{tpu_custom_call.1} parent=0
    #allocation2 [shape = 'u8[4096]{0}', space=vmem, size = 0x1000, scoped, tag = 'input window, operand 0, single buffered']
    #allocation3 [shape = 's32[1]{0}', space=sflag, size = 0x4, scoped, tag = 'scoped memory for tpu_custom_call.1']
    #allocation4 [shape = 's32[1]{0}', space=sflag, size = 0x4, scoped, tag = 'scoped memory for tpu_custom_call.1']
    #allocation5 [shape = 'u8[32768]{0}', space=vmem, size = 0x8000, scoped, tag = 'input window, operand 1, single buffered']
    #allocation6 [shape = 's32[1]{0}', space=sflag, size = 0x4, scoped, tag = 'scoped memory for tpu_custom_call.1']
    #allocation7 [shape = 'u8[32768]{0}', space=vmem, size = 0x8000, scoped, tag = 'input window, operand 3, single buffered']
    #allocation8 [shape = 'u8[32768]{0}', space=vmem, size = 0x8000, scoped, tag = 'input window, operand 5, single buffered']
    #allocation9 [shape = 's32[1]{0}', space=sflag, size = 0x4, scoped, tag = 'scoped memory for tpu_custom_call.1']
    #allocation10 [shape = 'u8[8192]{0}', space=vmem, size = 0x2000, scoped, tag = 'output window, operand 0, single buffered']
    %12 = vsyncpa [#allocation3], 0
    %13 = vsyncpa [#allocation6], 0
    %14 = vsyncpa [#allocation9], 0
    %15 = vsyncpa [#allocation4], 0
    // Predicated region
    $region2: #{tpu_custom_call.1} parent=1 // pred_check
      _
    $region3: #{tpu_custom_call.1} parent=1 // pred_check_branch
      %17 = sbr.rel (0) target = $region5
    $region4: #{tpu_custom_call.1} parent=1 // pred_region
      %s19 = ssub.s32 128, 128
      %20 = vsyncadd [#allocation3], %s19
      %s21 = sshll.u32 [#allocation2], 4
      %s22 = int_to_ptr.vmem [resolvable:$true] %s21
      %27 = dma.hbm_to_vmem [thread:$0]  %s0, 128, %s22, [#allocation3], 64, 64, 4
    $region5: #{tpu_custom_call.1} parent=1 // pred_fallthru
      _
    // Predicated region
    $region6: #{tpu_custom_call.1} parent=1 // pred_check
      _
    $region7: #{tpu_custom_call.1} parent=1 // pred_check_branch
      %29 = sbr.rel (0) target = $region9
    $region8: #{tpu_custom_call.1} parent=1 // pred_region
      %s31 = ssub.s32 1024, 1024
      %32 = vsyncadd [#allocation6], %s31
      %s33 = sshll.u32 [#allocation5], 4
      %s34 = int_to_ptr.vmem [resolvable:$true] %s33
      %39 = dma.hbm_to_vmem [thread:$0]  %s1, 1024, %s34, [#allocation6], 64, 64, 4
    $region9: #{tpu_custom_call.1} parent=1 // pred_fallthru
      _
    // Predicated region
    $region10: #{tpu_custom_call.1} parent=1 // pred_check
      _
    $region11: #{tpu_custom_call.1} parent=1 // pred_check_branch
      %41 = sbr.rel (0) target = $region13
    $region12: #{tpu_custom_call.1} parent=1 // pred_region
      _
    $region13: #{tpu_custom_call.1} parent=1 // pred_fallthru
      _
    // Predicated region
    $region14: #{tpu_custom_call.1} parent=1 // pred_check
      _
    $region15: #{tpu_custom_call.1} parent=1 // pred_check_branch
      %43 = sbr.rel (0) target = $region17
    $region16: #{tpu_custom_call.1} parent=1 // pred_region
      %s45 = ssub.s32 1024, 1024
      %46 = vsyncadd [#allocation6], %s45
      %s47 = sshll.u32 [#allocation7], 4
      %s48 = int_to_ptr.vmem [resolvable:$true] %s47
      %53 = dma.hbm_to_vmem [thread:$0]  %s3, 1024, %s48, [#allocation6], 64, 64, 4
    $region17: #{tpu_custom_call.1} parent=1 // pred_fallthru
      _
    // Predicated region
    $region18: #{tpu_custom_call.1} parent=1 // pred_check
      _
    $region19: #{tpu_custom_call.1} parent=1 // pred_check_branch
      %55 = sbr.rel (0) target = $region21
    $region20: #{tpu_custom_call.1} parent=1 // pred_region
      _
    $region21: #{tpu_custom_call.1} parent=1 // pred_fallthru
      _
    // Predicated region
    $region22: #{tpu_custom_call.1} parent=1 // pred_check
      _
    $region23: #{tpu_custom_call.1} parent=1 // pred_check_branch
      %57 = sbr.rel (0) target = $region25
    $region24: #{tpu_custom_call.1} parent=1 // pred_region
      %s59 = ssub.s32 1024, 1024
      %60 = vsyncadd [#allocation9], %s59
      %s61 = sshll.u32 [#allocation8], 4
      %s62 = int_to_ptr.vmem [resolvable:$true] %s61
      %67 = dma.hbm_to_vmem [thread:$0]  %s5, 1024, %s62, [#allocation9], 64, 64, 4
    $region25: #{tpu_custom_call.1} parent=1 // pred_fallthru
      _
    // Predicated region
    $region26: #{tpu_custom_call.1} parent=1 // pred_check
      _
    $region27: #{tpu_custom_call.1} parent=1 // pred_check_branch
      %69 = sbr.rel (0) target = $region29
    $region28: #{tpu_custom_call.1} parent=1 // pred_region
      _
    $region29: #{tpu_custom_call.1} parent=1 // pred_fallthru
      _
    // Predicated region
    $region30: #{tpu_custom_call.1} parent=1 // pred_check
      _
    $region31: #{tpu_custom_call.1} parent=1 // pred_check_branch
      %71 = sbr.rel (0) target = $region33
    $region32: #{tpu_custom_call.1} parent=1 // pred_region
      %72 = dma.done [#allocation3], 128
    $region33: #{tpu_custom_call.1} parent=1 // pred_fallthru
      _
    // Predicated region
    $region34: #{tpu_custom_call.1} parent=1 // pred_check
      _
    $region35: #{tpu_custom_call.1} parent=1 // pred_check_branch
      %74 = sbr.rel (0) target = $region37
    $region36: #{tpu_custom_call.1} parent=1 // pred_region
      %75 = dma.done [#allocation6], 1024
    $region37: #{tpu_custom_call.1} parent=1 // pred_fallthru
      _
    // Predicated region
    $region38: #{tpu_custom_call.1} parent=1 // pred_check
      _
    $region39: #{tpu_custom_call.1} parent=1 // pred_check_branch
      %77 = sbr.rel (0) target = $region41
    $region40: #{tpu_custom_call.1} parent=1 // pred_region
      %78 = dma.done [#allocation6], 1024
    $region41: #{tpu_custom_call.1} parent=1 // pred_fallthru
      _
    // Predicated region
    $region42: #{tpu_custom_call.1} parent=1 // pred_check
      _
    $region43: #{tpu_custom_call.1} parent=1 // pred_check_branch
      %80 = sbr.rel (0) target = $region45
    $region44: #{tpu_custom_call.1} parent=1 // pred_region
      %81 = dma.done [#allocation9], 1024
    $region45: #{tpu_custom_call.1} parent=1 // pred_fallthru
      _
    %v83 = vld [vmem:[#allocation2] sm:$0xf]
    %v84 = vld [vmem:[#allocation2 + $0x4] sm:$0xf]
    %v85 = vld [vmem:[#allocation8] sm:$0xf]
    %v86 = vld [vmem:[#allocation8 + $0x4] sm:$0xf]
    %v87 = vld [vmem:[#allocation8 + $0x8] sm:$0xf]
    %v88 = vld [vmem:[#allocation8 + $0xc] sm:$0xf]
    %v89 = vld [vmem:[#allocation8 + $0x10] sm:$0xf]
    %v90 = vld [vmem:[#allocation8 + $0x14] sm:$0xf]
    %v91 = vld [vmem:[#allocation8 + $0x18] sm:$0xf]
    %v92 = vld [vmem:[#allocation8 + $0x1c] sm:$0xf]
    %v93 = vld [vmem:[#allocation8 + $0x20] sm:$0xf]
    %v94 = vld [vmem:[#allocation8 + $0x24] sm:$0xf]
    %v95 = vld [vmem:[#allocation8 + $0x28] sm:$0xf]
    %v96 = vld [vmem:[#allocation8 + $0x2c] sm:$0xf]
    %v97 = vld [vmem:[#allocation8 + $0x30] sm:$0xf]
    %v98 = vld [vmem:[#allocation8 + $0x34] sm:$0xf]
    %v99 = vld [vmem:[#allocation8 + $0x38] sm:$0xf]
    %v100 = vld [vmem:[#allocation8 + $0x3c] sm:$0xf]
    %v101 = vld [vmem:[%s6] sm:$0x1]
    %v103 = vlaneseq
    %v104 = vshrl.u32 %v103, 7
    %v105 = vsub.s32 0, %v104
    %v106 = vrot.slane %v101, %v105
    %v110 = vunpack.c.l.b16 %v83
    %v111 = vunpack.c.l.b16 %v84
    %v112 = vpack.c.b16 %v111, %v110
    %v130 = vunpack.c.l.b16 %v85
    %v131 = vunpack.c.l.b16 %v86
    %v132 = vunpack.c.l.b16 %v87
    %v133 = vunpack.c.l.b16 %v88
    %v134 = vunpack.c.l.b16 %v89
    %v135 = vunpack.c.l.b16 %v90
    %v136 = vunpack.c.l.b16 %v91
    %v137 = vunpack.c.l.b16 %v92
    %v138 = vunpack.c.l.b16 %v93
    %v139 = vunpack.c.l.b16 %v94
    %v140 = vunpack.c.l.b16 %v95
    %v141 = vunpack.c.l.b16 %v96
    %v142 = vunpack.c.l.b16 %v97
    %v143 = vunpack.c.l.b16 %v98
    %v144 = vunpack.c.l.b16 %v99
    %v145 = vunpack.c.l.b16 %v100
    %v146 = vpack.c.b16 %v131, %v130
    %v147 = vpack.c.b16 %v133, %v132
    %v148 = vpack.c.b16 %v135, %v134
    %v149 = vpack.c.b16 %v137, %v136
    %v150 = vpack.c.b16 %v139, %v138
    %v151 = vpack.c.b16 %v141, %v140
    %v152 = vpack.c.b16 %v143, %v142
    %v153 = vpack.c.b16 %v145, %v144
    %162 = vmatprep.subr.bf16.mxu0 0
    %163 = vmatpush1.bf16.msra.mxu0 %v153
    %164 = vmatprep.subr.bf16.mxu0 0
    %165 = vmatpush1.bf16.msra.mxu0 %v152
    %166 = vmatprep.subr.bf16.mxu0 0
    %167 = vmatpush1.bf16.msra.mxu0 %v151
    %168 = vmatprep.subr.bf16.mxu0 0
    %169 = vmatpush1.bf16.msra.mxu0 %v150
    %170 = vmatprep.subr.bf16.mxu0 0
    %171 = vmatpush1.bf16.msra.mxu0 %v149
    %172 = vmatprep.subr.bf16.mxu0 0
    %173 = vmatpush1.bf16.msra.mxu0 %v148
    %174 = vmatprep.subr.bf16.mxu0 0
    %175 = vmatpush1.bf16.msra.mxu0 %v147
    %176 = vmatprep.subr.bf16.mxu0 0
    %177 = vmatpush1.bf16.msra.mxu0 %v146
    %178 = vmatprep.subr.bf16.mxu0 0
    %179 = vmatpush2.bf16.msra.mxu0 0
    %180 = vmatprep.subr.bf16.mxu0 0
    %181 = vmatpush2.bf16.msra.mxu0 0
    %182 = vmatprep.subr.bf16.mxu0 0
    %183 = vmatpush2.bf16.msra.mxu0 0
    %184 = vmatprep.subr.bf16.mxu0 0
    %185 = vmatpush2.bf16.msra.mxu0 0
    %186 = vmatprep.subr.bf16.mxu0 0
    %187 = vmatpush2.bf16.msra.mxu0 0
    %188 = vmatprep.subr.bf16.mxu0 0
    %189 = vmatpush2.bf16.msra.mxu0 0
    %190 = vmatprep.subr.bf16.mxu0 0
    %191 = vmatpush2.bf16.msra.mxu0 0
    %192 = vmatprep.subr.bf16.mxu0 0
    %193 = vmatpush2.bf16.msra.mxu0 0
    %194 = vmatprep.mubr.bf16.mxu0 0
    %195 = vmatmul.mubr.bf16.gmra.mxu0 %v112
    %v196 = vpop.f32.mrf.mxu0
    %v197 = vadd.f32 %v106, %v196
    %v198 = vpop.f32.mrf.mxu0
    %v199 = vpop.f32.mrf.mxu0
    %v200 = vadd.f32 %v106, %v199
    %v201 = vpop.f32.mrf.mxu0
    %202 = vdwg.mxu0
    %v203 = vld [vmem:[#allocation5] sm:$0xf]
    %v204 = vld [vmem:[#allocation5 + $0x4] sm:$0xf]
    %v205 = vld [vmem:[#allocation5 + $0x8] sm:$0xf]
    %v206 = vld [vmem:[#allocation5 + $0xc] sm:$0xf]
    %v207 = vld [vmem:[#allocation5 + $0x10] sm:$0xf]
    %v208 = vld [vmem:[#allocation5 + $0x14] sm:$0xf]
    %v209 = vld [vmem:[#allocation5 + $0x18] sm:$0xf]
    %v210 = vld [vmem:[#allocation5 + $0x1c] sm:$0xf]
    %v211 = vld [vmem:[#allocation5 + $0x20] sm:$0xf]
    %v212 = vld [vmem:[#allocation5 + $0x24] sm:$0xf]
    %v213 = vld [vmem:[#allocation5 + $0x28] sm:$0xf]
    %v214 = vld [vmem:[#allocation5 + $0x2c] sm:$0xf]
    %v215 = vld [vmem:[#allocation5 + $0x30] sm:$0xf]
    %v216 = vld [vmem:[#allocation5 + $0x34] sm:$0xf]
    %v217 = vld [vmem:[#allocation5 + $0x38] sm:$0xf]
    %v218 = vld [vmem:[#allocation5 + $0x3c] sm:$0xf]
    %v219 = vld [vmem:[%s2] sm:$0x1]
    %v221 = vlaneseq
    %v222 = vshrl.u32 %v221, 7
    %v223 = vsub.s32 0, %v222
    %v224 = vrot.slane %v219, %v223
    %v242 = vunpack.c.l.b16 %v203
    %v243 = vunpack.c.l.b16 %v204
    %v244 = vunpack.c.l.b16 %v205
    %v245 = vunpack.c.l.b16 %v206
    %v246 = vunpack.c.l.b16 %v207
    %v247 = vunpack.c.l.b16 %v208
    %v248 = vunpack.c.l.b16 %v209
    %v249 = vunpack.c.l.b16 %v210
    %v250 = vunpack.c.l.b16 %v211
    %v251 = vunpack.c.l.b16 %v212
    %v252 = vunpack.c.l.b16 %v213
    %v253 = vunpack.c.l.b16 %v214
    %v254 = vunpack.c.l.b16 %v215
    %v255 = vunpack.c.l.b16 %v216
    %v256 = vunpack.c.l.b16 %v217
    %v257 = vunpack.c.l.b16 %v218
    %v258 = vpack.c.b16 %v243, %v242
    %v259 = vpack.c.b16 %v245, %v244
    %v260 = vpack.c.b16 %v247, %v246
    %v261 = vpack.c.b16 %v249, %v248
    %v262 = vpack.c.b16 %v251, %v250
    %v263 = vpack.c.b16 %v253, %v252
    %v264 = vpack.c.b16 %v255, %v254
    %v265 = vpack.c.b16 %v257, %v256
    %274 = vmatprep.subr.bf16.mxu0 0
    %275 = vmatpush1.bf16.msra.mxu0 %v265
    %276 = vmatprep.subr.bf16.mxu0 0
    %277 = vmatpush1.bf16.msra.mxu0 %v264
    %278 = vmatprep.subr.bf16.mxu0 0
    %279 = vmatpush1.bf16.msra.mxu0 %v263
    %280 = vmatprep.subr.bf16.mxu0 0
    %281 = vmatpush1.bf16.msra.mxu0 %v262
    %282 = vmatprep.subr.bf16.mxu0 0
    %283 = vmatpush1.bf16.msra.mxu0 %v261
    %284 = vmatprep.subr.bf16.mxu0 0
    %285 = vmatpush1.bf16.msra.mxu0 %v260
    %286 = vmatprep.subr.bf16.mxu0 0
    %287 = vmatpush1.bf16.msra.mxu0 %v259
    %288 = vmatprep.subr.bf16.mxu0 0
    %289 = vmatpush1.bf16.msra.mxu0 %v258
    %290 = vmatprep.subr.bf16.mxu0 0
    %291 = vmatpush2.bf16.msra.mxu0 0
    %292 = vmatprep.subr.bf16.mxu0 0
    %293 = vmatpush2.bf16.msra.mxu0 0
    %294 = vmatprep.subr.bf16.mxu0 0
    %295 = vmatpush2.bf16.msra.mxu0 0
    %296 = vmatprep.subr.bf16.mxu0 0
    %297 = vmatpush2.bf16.msra.mxu0 0
    %298 = vmatprep.subr.bf16.mxu0 0
    %299 = vmatpush2.bf16.msra.mxu0 0
    %300 = vmatprep.subr.bf16.mxu0 0
    %301 = vmatpush2.bf16.msra.mxu0 0
    %302 = vmatprep.subr.bf16.mxu0 0
    %303 = vmatpush2.bf16.msra.mxu0 0
    %304 = vmatprep.subr.bf16.mxu0 0
    %305 = vmatpush2.bf16.msra.mxu0 0
    %306 = vmatprep.mubr.bf16.mxu0 0
    %307 = vmatmul.mubr.bf16.gmra.mxu0 %v112
    %v308 = vpop.f32.mrf.mxu0
    %v309 = vadd.f32 %v224, %v308
    %v310 = vpop.f32.mrf.mxu0
    %v311 = vpop.f32.mrf.mxu0
    %v312 = vadd.f32 %v224, %v311
    %v313 = vpop.f32.mrf.mxu0
    %314 = vdwg.mxu0
    %v315 = vmax.f32 %v309, 0.0
    %v316 = vmax.f32 %v312, 0.0
    %v317 = vpack.c.bf16 %v316, %v315
    %v318 = vld [vmem:[#allocation7] sm:$0xf]
    %v319 = vld [vmem:[#allocation7 + $0x4] sm:$0xf]
    %v320 = vld [vmem:[#allocation7 + $0x8] sm:$0xf]
    %v321 = vld [vmem:[#allocation7 + $0xc] sm:$0xf]
    %v322 = vld [vmem:[#allocation7 + $0x10] sm:$0xf]
    %v323 = vld [vmem:[#allocation7 + $0x14] sm:$0xf]
    %v324 = vld [vmem:[#allocation7 + $0x18] sm:$0xf]
    %v325 = vld [vmem:[#allocation7 + $0x1c] sm:$0xf]
    %v326 = vld [vmem:[#allocation7 + $0x20] sm:$0xf]
    %v327 = vld [vmem:[#allocation7 + $0x24] sm:$0xf]
    %v328 = vld [vmem:[#allocation7 + $0x28] sm:$0xf]
    %v329 = vld [vmem:[#allocation7 + $0x2c] sm:$0xf]
    %v330 = vld [vmem:[#allocation7 + $0x30] sm:$0xf]
    %v331 = vld [vmem:[#allocation7 + $0x34] sm:$0xf]
    %v332 = vld [vmem:[#allocation7 + $0x38] sm:$0xf]
    %v333 = vld [vmem:[#allocation7 + $0x3c] sm:$0xf]
    %v334 = vld [vmem:[%s4] sm:$0x1]
    %v336 = vlaneseq
    %v337 = vshrl.u32 %v336, 7
    %v338 = vsub.s32 0, %v337
    %v339 = vrot.slane %v334, %v338
    %v357 = vunpack.c.l.b16 %v318
    %v358 = vunpack.c.l.b16 %v319
    %v359 = vunpack.c.l.b16 %v320
    %v360 = vunpack.c.l.b16 %v321
    %v361 = vunpack.c.l.b16 %v322
    %v362 = vunpack.c.l.b16 %v323
    %v363 = vunpack.c.l.b16 %v324
    %v364 = vunpack.c.l.b16 %v325
    %v365 = vunpack.c.l.b16 %v326
    %v366 = vunpack.c.l.b16 %v327
    %v367 = vunpack.c.l.b16 %v328
    %v368 = vunpack.c.l.b16 %v329
    %v369 = vunpack.c.l.b16 %v330
    %v370 = vunpack.c.l.b16 %v331
    %v371 = vunpack.c.l.b16 %v332
    %v372 = vunpack.c.l.b16 %v333
    %v373 = vpack.c.b16 %v358, %v357
    %v374 = vpack.c.b16 %v360, %v359
    %v375 = vpack.c.b16 %v362, %v361
    %v376 = vpack.c.b16 %v364, %v363
    %v377 = vpack.c.b16 %v366, %v365
    %v378 = vpack.c.b16 %v368, %v367
    %v379 = vpack.c.b16 %v370, %v369
    %v380 = vpack.c.b16 %v372, %v371
    %389 = vmatprep.subr.bf16.mxu0 0
    %390 = vmatpush1.bf16.msra.mxu0 %v380
    %391 = vmatprep.subr.bf16.mxu0 0
    %392 = vmatpush1.bf16.msra.mxu0 %v379
    %393 = vmatprep.subr.bf16.mxu0 0
    %394 = vmatpush1.bf16.msra.mxu0 %v378
    %395 = vmatprep.subr.bf16.mxu0 0
    %396 = vmatpush1.bf16.msra.mxu0 %v377
    %397 = vmatprep.subr.bf16.mxu0 0
    %398 = vmatpush1.bf16.msra.mxu0 %v376
    %399 = vmatprep.subr.bf16.mxu0 0
    %400 = vmatpush1.bf16.msra.mxu0 %v375
    %401 = vmatprep.subr.bf16.mxu0 0
    %402 = vmatpush1.bf16.msra.mxu0 %v374
    %403 = vmatprep.subr.bf16.mxu0 0
    %404 = vmatpush1.bf16.msra.mxu0 %v373
    %405 = vmatprep.subr.bf16.mxu0 0
    %406 = vmatpush2.bf16.msra.mxu0 0
    %407 = vmatprep.subr.bf16.mxu0 0
    %408 = vmatpush2.bf16.msra.mxu0 0
    %409 = vmatprep.subr.bf16.mxu0 0
    %410 = vmatpush2.bf16.msra.mxu0 0
    %411 = vmatprep.subr.bf16.mxu0 0
    %412 = vmatpush2.bf16.msra.mxu0 0
    %413 = vmatprep.subr.bf16.mxu0 0
    %414 = vmatpush2.bf16.msra.mxu0 0
    %415 = vmatprep.subr.bf16.mxu0 0
    %416 = vmatpush2.bf16.msra.mxu0 0
    %417 = vmatprep.subr.bf16.mxu0 0
    %418 = vmatpush2.bf16.msra.mxu0 0
    %419 = vmatprep.subr.bf16.mxu0 0
    %420 = vmatpush2.bf16.msra.mxu0 0
    %421 = vmatprep.mubr.bf16.mxu0 0
    %422 = vmatmul.mubr.bf16.gmra.mxu0 %v317
    %v423 = vpop.f32.mrf.mxu0
    %v424 = vadd.f32 %v339, %v423
    %v425 = vpop.f32.mrf.mxu0
    %v426 = vpop.f32.mrf.mxu0
    %v427 = vadd.f32 %v339, %v426
    %v428 = vpop.f32.mrf.mxu0
    %429 = vdwg.mxu0
    %v430 = vadd.f32 %v424, %v197
    %v431 = vadd.f32 %v427, %v200
    %v432 = vmax.f32 %v430, 0.0
    %v433 = vmax.f32 %v431, 0.0
    %434 = vst [vmem:[#allocation10] sm:$0xff] %v432
    %435 = vst [vmem:[#allocation10 + $0x8] sm:$0xff] %v433
    // Predicated region
    $region46: #{tpu_custom_call.1} parent=1 // pred_check
      _
    $region47: #{tpu_custom_call.1} parent=1 // pred_check_branch
      %437 = sbr.rel (0) target = $region49
    $region48: #{tpu_custom_call.1} parent=1 // pred_region
      %s439 = ssub.s32 256, 256
      %440 = vsyncadd [#allocation4], %s439
      %s441 = sshll.u32 [#allocation10], 4
      %s442 = int_to_ptr.vmem [resolvable:$true] %s441
      %447 = dma.vmem_to_hbm [thread:$0]  %s442, 256, %s7, [#allocation4], 128, 128, 8
    $region49: #{tpu_custom_call.1} parent=1 // pred_fallthru
      _
    // Predicated region
    $region50: #{tpu_custom_call.1} parent=1 // pred_check
      _
    $region51: #{tpu_custom_call.1} parent=1 // pred_check_branch
      %449 = sbr.rel (0) target = $region53
    $region52: #{tpu_custom_call.1} parent=1 // pred_region
      %450 = dma.done [#allocation4], 256
    $region53: #{tpu_custom_call.1} parent=1 // pred_fallthru
      _
    %451 = vsyncpa [#allocation3], 1
    %452 = vsyncpa [#allocation6], 1
    %453 = vsyncpa [#allocation9], 1
    %454 = vsyncpa [#allocation4], 1

</llo_original>
